<compile_context>
chip_gen: v5e
topology: v5e:2x2
jax: 0.10.0
libtpu: 0.0.40
codegen_flags: <defaults>
</compile_context>

<pallas_src>
import jax
import jax.numpy as jnp
import numpy as np
from jax.experimental import pallas as pl
from jax.experimental.pallas import tpu as pltpu


# ----------------------------------------------------------------------------
# Row-layout MLP (PyTorch orientation weights) -- used for the tiny branch path
# and for the pure-JAX reference.  Structure matches the module:
#   in_layer (no act) -> (Linear, Tanh) * n_layers -> Linear (no act) -> out_layer
# ----------------------------------------------------------------------------
def _mlp_rows(x, w_in, b_in, w_hid, b_hid, w_out, b_out):
    h = x @ w_in.T + b_in.T
    n_hid = w_hid.shape[0]                      # n_layers + 1 stacked matrices
    for l in range(n_hid - 1):
        h = jnp.tanh(h @ w_hid[l].T + b_hid[l].T)
    h = h @ w_hid[n_hid - 1].T + b_hid[n_hid - 1].T
    return h @ w_out.T + b_out.T


# ----------------------------------------------------------------------------
# Pallas kernel: transposed trunk MLP + folded branch reduction.
#   x_ref     : (2, TILE_N)          query points (lane = point index)
#   w_in_ref  : (h_t, 2)             PyTorch orientation
#   b_in_ref  : (h_t, 1)
#   w_hid_ref : (n_hid, h_t, h_t)
#   b_hid_ref : (n_hid, h_t, 1)
#   w_eff_ref : (1, h_t)             branch folded into trunk out layer
#   b_eff_ref : (1, 1)
#   out_ref   : (1, TILE_N)          lane-dense output
# ----------------------------------------------------------------------------
def trunk_deeponet_kernel(x_ref, w_in_ref, b_in_ref, w_hid_ref, b_hid_ref,
                          w_eff_ref, b_eff_ref, out_ref):
    cd = w_in_ref.dtype                               # matmul compute dtype
    x = x_ref[...].astype(cd)                         # (2, TILE_N)
    h = jnp.dot(w_in_ref[...], x,
                preferred_element_type=jnp.float32) + b_in_ref[...]
    n_hid = w_hid_ref.shape[0]
    for l in range(n_hid - 1):                        # static unrolled loop
        h = jnp.tanh(
            jnp.dot(w_hid_ref[l], h.astype(cd),
                    preferred_element_type=jnp.float32) + b_hid_ref[l])
    h = jnp.dot(w_hid_ref[n_hid - 1], h.astype(cd),
                preferred_element_type=jnp.float32) + b_hid_ref[n_hid - 1]
    out_ref[...] = (jnp.dot(w_eff_ref[...], h.astype(cd),
                            preferred_element_type=jnp.float32)
                    + b_eff_ref[...])


# ----------------------------------------------------------------------------
# Wrapper
# ----------------------------------------------------------------------------
def deeponet_sphere2d_forward(domainPoints, domainFunc, fixDomPoints, params,
                              tile_n=512, compute_dtype=jnp.float32):
    # torch.cat(domainPoints, dim=1)
    trunk_in = jnp.concatenate(domainPoints, axis=1).astype(jnp.float32)  # (N, 2)
    n_points, in_dim = trunk_in.shape
    n_fix = fixDomPoints[0].shape[0]

    # --- branch path: tiny (1, n_fix) row -> plain JAX, then fold ----------
    # domainFunc is an arbitrary user callable, evaluated in JAX glue.
    f_vals = domainFunc(fixDomPoints).reshape(1, n_fix).astype(jnp.float32)
    branch_row = _mlp_rows(f_vals, *params["branch"])                     # (1, nmax)

    tw_in, tb_in, tw_hid, tb_hid, tw_out, tb_out = params["trunk"]
    h_t = tw_in.shape[0]
    n_hid = tw_hid.shape[0]

    # Fold branch into the trunk output layer:
    #   sum_k branch_k * (W_out @ h + b_out)_k  ==  (branch@W_out) @ h + branch@b_out
    w_eff = (branch_row @ tw_out).astype(compute_dtype)                   # (1, h_t)
    b_eff = (branch_row @ tb_out).astype(jnp.float32)                     # (1, 1)

    w_in_c = tw_in.astype(compute_dtype)
    w_hid_c = tw_hid.astype(compute_dtype)
    b_in_f = tb_in.astype(jnp.float32)
    b_hid_f = tb_hid.astype(jnp.float32)

    # --- transpose so N is on the lane axis, pad to a tile multiple --------
    n_tiles = pl.cdiv(n_points, tile_n)
    n_pad = n_tiles * tile_n
    x_t = jnp.zeros((in_dim, n_pad), jnp.float32).at[:, :n_points].set(trunk_in.T)

    out_row = pl.pallas_call(
        trunk_deeponet_kernel,
        out_shape=jax.ShapeDtypeStruct((1, n_pad), jnp.float32),
        grid=(n_tiles,),
        in_specs=[
            pl.BlockSpec((in_dim, tile_n), lambda i: (0, i)),       # points
            pl.BlockSpec((h_t, in_dim), lambda i: (0, 0)),          # W_in
            pl.BlockSpec((h_t, 1), lambda i: (0, 0)),               # b_in
            pl.BlockSpec((n_hid, h_t, h_t), lambda i: (0, 0, 0)),   # stacked W_hid
            pl.BlockSpec((n_hid, h_t, 1), lambda i: (0, 0, 0)),     # stacked b_hid
            pl.BlockSpec((1, h_t), lambda i: (0, 0)),               # folded out W
            pl.BlockSpec((1, 1), lambda i: (0, 0)),                 # folded out b
        ],
        out_specs=pl.BlockSpec((1, tile_n), lambda i: (0, i)),
        compiler_params=pltpu.CompilerParams(dimension_semantics=("parallel",)),
    )(x_t, w_in_c, b_in_f, w_hid_c, b_hid_f, w_eff, b_eff)

    return out_row[:, :n_points].reshape(n_points, 1)                    # (N, 1)


# ----------------------------------------------------------------------------
# Deterministic parameter init (PyTorch nn.Linear-style uniform bounds),
# stored in PyTorch orientation: W (out, in), b (out, 1).
# ----------------------------------------------------------------------------
def _linear_init(key, fan_in, fan_out):
    kw, kb = jax.random.split(key)
    bound = 1.0 / np.sqrt(fan_in)
    w = jax.random.uniform(kw, (fan_out, fan_in), jnp.float32, -bound, bound)
    b = jax.random.uniform(kb, (fan_out, 1), jnp.float32, -bound, bound)
    return w, b


def _make_mlp_params(key, in_dim, hidden, n_layers, out_dim):
    keys = jax.random.split(key, n_layers + 3)
    w_in, b_in = _linear_init(keys[0], in_dim, hidden)
    hid_w, hid_b = [], []
    for l in range(n_layers + 1):   # n_layers tanh-layers + final plain Linear
        w, b = _linear_init(keys[1 + l], hidden, hidden)
        hid_w.append(w)
        hid_b.append(b)
    w_out, b_out = _linear_init(keys[-1], hidden, out_dim)
    return (w_in, b_in, jnp.stack(hid_w), jnp.stack(hid_b), w_out, b_out)


# ----------------------------------------------------------------------------
# Pure-JAX reference (same math as the PyTorch module, no Pallas, no fold)
# ----------------------------------------------------------------------------
def reference_forward(domainPoints, domainFunc, fixDomPoints, params):
    trunk_in = jnp.concatenate(domainPoints, axis=1).astype(jnp.float32)
    n_fix = fixDomPoints[0].shape[0]
    f_vals = domainFunc(fixDomPoints).reshape(1, n_fix).astype(jnp.float32)
    branch = _mlp_rows(f_vals, *params["branch"])
    trunk = _mlp_rows(trunk_in, *params["trunk"])
    return jnp.sum(trunk * branch, axis=1, keepdims=True)


# ----------------------------------------------------------------------------
if __name__ == "__main__":
    key = jax.random.PRNGKey(0)
    k_pts, k_trunk, k_branch = jax.random.split(key, 3)

    # Small shapes consistent with the module's forward
    n_points = 1000           # number of (theta, phi) query points (not a tile multiple)
    n_hidden_trunk = 32
    n_layers_trunk = 2
    n_hidden_branch = 16
    n_layers_branch = 1
    n_fix = 64                # nFixDomPoints
    nmax = max(n_hidden_branch, n_hidden_trunk)
    tile_n = 512              # lane-dense tile; 2 grid steps for n_points=1000

    # Fixed domain points (the module's `fixDomPoints`: list of two (n_fix, 1))
    fix_theta = jnp.linspace(0.0, 1.0, n_fix, dtype=jnp.float32).reshape(n_fix, 1)
    fix_phi = jnp.linspace(-1.0, 1.0, n_fix, dtype=jnp.float32).reshape(n_fix, 1)
    fixDomPoints = [fix_theta, fix_phi]

    # Query domain points: list of two (N, 1) tensors, concatenated along dim=1
    kp1, kp2 = jax.random.split(k_pts)
    domainPoints = [
        jax.random.uniform(kp1, (n_points, 1), jnp.float32),
        jax.random.uniform(kp2, (n_points, 1), jnp.float32),
    ]

    # A deterministic domain function (stands in for the user-supplied callable)
    def domainFunc(pts):
        return jnp.sin(jnp.pi * pts[0]) * jnp.cos(jnp.pi * pts[1])

    params = {
        "trunk": _make_mlp_params(k_trunk, 2, n_hidden_trunk, n_layers_trunk, nmax),
        "branch": _make_mlp_params(k_branch, n_fix, n_hidden_branch, n_layers_branch, nmax),
    }

    ref = reference_forward(domainPoints, domainFunc, fixDomPoints, params)
    ref_np = np.asarray(jax.block_until_ready(ref))

    # --- f32 path (default): tight check ------------------------------------
    out = deeponet_sphere2d_forward(domainPoints, domainFunc, fixDomPoints,
                                    params, tile_n=tile_n,
                                    compute_dtype=jnp.float32)
    out = jax.block_until_ready(out)
    assert out.shape == (n_points, 1), out.shape
    np.testing.assert_allclose(np.asarray(out), ref_np, rtol=1e-4, atol=1e-5)

    # --- bf16 matmul path (v6e/v7x fast path): loose check -------------------
    out_bf16 = deeponet_sphere2d_forward(domainPoints, domainFunc, fixDomPoints,
                                         params, tile_n=tile_n,
                                         compute_dtype=jnp.bfloat16)
    out_bf16 = jax.block_until_ready(out_bf16)
    max_err = float(np.max(np.abs(np.asarray(out_bf16) - ref_np)))
    tol = 0.05 * (float(np.max(np.abs(ref_np))) + 1.0)
    assert max_err < tol, (max_err, tol)

    print("KERNEL_OK")
</pallas_src>

<mosaic_0001>
module attributes {stable_mosaic.version = 11 : i64} {
  func.func @trunk_deeponet_kernel(%arg0: i32, %arg1: memref<2x512xf32, #tpu.memory_space<vmem>>, %arg2: memref<32x2xf32, #tpu.memory_space<vmem>>, %arg3: memref<32x1xf32, #tpu.memory_space<vmem>>, %arg4: memref<3x32x32xf32, #tpu.memory_space<vmem>>, %arg5: memref<3x32x1xf32, #tpu.memory_space<vmem>>, %arg6: memref<1x32xf32, #tpu.memory_space<vmem>>, %arg7: memref<1x1xf32, #tpu.memory_space<vmem>>, %arg8: memref<1x512xf32, #tpu.memory_space<vmem>>) attributes {dimension_semantics = [#tpu.dimension_semantics<parallel>], iteration_bounds = array<i64: 2>, scalar_prefetch = 0 : i64, scratch_operands = 0 : i64, tpu.core_type = #tpu.core_type<tc>, window_params = [{transform_indices = @transform_0, window_bounds = array<i64: 2, 512>}, {pipeline_mode = #tpu.pipeline_mode<synchronous>, transform_indices = @transform_1, window_bounds = array<i64: 32, 2>}, {pipeline_mode = #tpu.pipeline_mode<synchronous>, transform_indices = @transform_2, window_bounds = array<i64: 32, 1>}, {pipeline_mode = #tpu.pipeline_mode<synchronous>, transform_indices = @transform_3, window_bounds = array<i64: 3, 32, 32>}, {pipeline_mode = #tpu.pipeline_mode<synchronous>, transform_indices = @transform_4, window_bounds = array<i64: 3, 32, 1>}, {pipeline_mode = #tpu.pipeline_mode<synchronous>, transform_indices = @transform_5, window_bounds = array<i64: 1, 32>}, {pipeline_mode = #tpu.pipeline_mode<synchronous>, transform_indices = @transform_6, window_bounds = array<i64: 1, 1>}, {transform_indices = @transform_7, window_bounds = array<i64: 1, 512>}]} {
    %c0 = arith.constant 0 : index
    %c0_0 = arith.constant 0 : index
    %0 = vector.load %arg1[%c0, %c0_0] : memref<2x512xf32, #tpu.memory_space<vmem>>, vector<2x512xf32>
    %c0_1 = arith.constant 0 : index
    %c0_2 = arith.constant 0 : index
    %1 = vector.load %arg2[%c0_1, %c0_2] : memref<32x2xf32, #tpu.memory_space<vmem>>, vector<32x2xf32>
    %cst = arith.constant dense<0.000000e+00> : vector<32x512xf32>
    %2 = tpu.matmul %1, %0, %cst {dimension_numbers = #tpu.dot_dimension_numbers<[1], [0], [0], [1], [0, 0, 1, 1], [], []>} : vector<32x2xf32>, vector<2x512xf32>, vector<32x512xf32> -> vector<32x512xf32>
    %c0_3 = arith.constant 0 : index
    %c0_4 = arith.constant 0 : index
    %3 = vector.load %arg3[%c0_3, %c0_4] : memref<32x1xf32, #tpu.memory_space<vmem>>, vector<32x1xf32>
    %4 = vector.broadcast %3 : vector<32x1xf32> to vector<32x512xf32>
    %5 = arith.addf %2, %4 : vector<32x512xf32>
    %c0_5 = arith.constant 0 : index
    %c0_6 = arith.constant 0 : index
    %c0_7 = arith.constant 0 : index
    %6 = vector.load %arg4[%c0_5, %c0_6, %c0_7] : memref<3x32x32xf32, #tpu.memory_space<vmem>>, vector<1x32x32xf32>
    %7 = vector.shape_cast %6 : vector<1x32x32xf32> to vector<32x32xf32>
    %cst_8 = arith.constant dense<0.000000e+00> : vector<32x512xf32>
    %8 = tpu.matmul %7, %5, %cst_8 {dimension_numbers = #tpu.dot_dimension_numbers<[1], [0], [0], [1], [0, 0, 1, 1], [], []>} : vector<32x32xf32>, vector<32x512xf32>, vector<32x512xf32> -> vector<32x512xf32>
    %c0_9 = arith.constant 0 : index
    %c0_10 = arith.constant 0 : index
    %c0_11 = arith.constant 0 : index
    %9 = vector.load %arg5[%c0_9, %c0_10, %c0_11] : memref<3x32x1xf32, #tpu.memory_space<vmem>>, vector<1x32x1xf32>
    %10 = vector.shape_cast %9 : vector<1x32x1xf32> to vector<32x1xf32>
    %11 = vector.broadcast %10 : vector<32x1xf32> to vector<32x512xf32>
    %12 = arith.addf %8, %11 : vector<32x512xf32>
    %13 = math.tanh %12 : vector<32x512xf32>
    %c1 = arith.constant 1 : index
    %c0_12 = arith.constant 0 : index
    %c0_13 = arith.constant 0 : index
    %14 = vector.load %arg4[%c1, %c0_12, %c0_13] : memref<3x32x32xf32, #tpu.memory_space<vmem>>, vector<1x32x32xf32>
    %15 = vector.shape_cast %14 : vector<1x32x32xf32> to vector<32x32xf32>
    %cst_14 = arith.constant dense<0.000000e+00> : vector<32x512xf32>
    %16 = tpu.matmul %15, %13, %cst_14 {dimension_numbers = #tpu.dot_dimension_numbers<[1], [0], [0], [1], [0, 0, 1, 1], [], []>} : vector<32x32xf32>, vector<32x512xf32>, vector<32x512xf32> -> vector<32x512xf32>
    %c1_15 = arith.constant 1 : index
    %c0_16 = arith.constant 0 : index
    %c0_17 = arith.constant 0 : index
    %17 = vector.load %arg5[%c1_15, %c0_16, %c0_17] : memref<3x32x1xf32, #tpu.memory_space<vmem>>, vector<1x32x1xf32>
    %18 = vector.shape_cast %17 : vector<1x32x1xf32> to vector<32x1xf32>
    %19 = vector.broadcast %18 : vector<32x1xf32> to vector<32x512xf32>
    %20 = arith.addf %16, %19 : vector<32x512xf32>
    %21 = math.tanh %20 : vector<32x512xf32>
    %c2 = arith.constant 2 : index
    %c0_18 = arith.constant 0 : index
    %c0_19 = arith.constant 0 : index
    %22 = vector.load %arg4[%c2, %c0_18, %c0_19] : memref<3x32x32xf32, #tpu.memory_space<vmem>>, vector<1x32x32xf32>
    %23 = vector.shape_cast %22 : vector<1x32x32xf32> to vector<32x32xf32>
    %cst_20 = arith.constant dense<0.000000e+00> : vector<32x512xf32>
    %24 = tpu.matmul %23, %21, %cst_20 {dimension_numbers = #tpu.dot_dimension_numbers<[1], [0], [0], [1], [0, 0, 1, 1], [], []>} : vector<32x32xf32>, vector<32x512xf32>, vector<32x512xf32> -> vector<32x512xf32>
    %c2_21 = arith.constant 2 : index
    %c0_22 = arith.constant 0 : index
    %c0_23 = arith.constant 0 : index
    %25 = vector.load %arg5[%c2_21, %c0_22, %c0_23] : memref<3x32x1xf32, #tpu.memory_space<vmem>>, vector<1x32x1xf32>
    %26 = vector.shape_cast %25 : vector<1x32x1xf32> to vector<32x1xf32>
    %27 = vector.broadcast %26 : vector<32x1xf32> to vector<32x512xf32>
    %28 = arith.addf %24, %27 : vector<32x512xf32>
    %c0_24 = arith.constant 0 : index
    %c0_25 = arith.constant 0 : index
    %29 = vector.load %arg6[%c0_24, %c0_25] : memref<1x32xf32, #tpu.memory_space<vmem>>, vector<1x32xf32>
    %cst_26 = arith.constant dense<0.000000e+00> : vector<1x512xf32>
    %30 = tpu.matmul %29, %28, %cst_26 {dimension_numbers = #tpu.dot_dimension_numbers<[1], [0], [0], [1], [0, 0, 1, 1], [], []>} : vector<1x32xf32>, vector<32x512xf32>, vector<1x512xf32> -> vector<1x512xf32>
    %c0_27 = arith.constant 0 : index
    %c0_28 = arith.constant 0 : index
    %31 = vector.load %arg7[%c0_27, %c0_28] : memref<1x1xf32, #tpu.memory_space<vmem>>, vector<1x1xf32>
    %32 = vector.broadcast %31 : vector<1x1xf32> to vector<1x512xf32>
    %33 = arith.addf %30, %32 : vector<1x512xf32>
    %c0_29 = arith.constant 0 : index
    %c0_30 = arith.constant 0 : index
    %34 = vector.load %arg8[%c0_29, %c0_30] : memref<1x512xf32, #tpu.memory_space<vmem>>, vector<1x512xf32>
    tpu.vector_store %arg8[%c0_29, %c0_30], %33 {strides = array<i32>} : memref<1x512xf32, #tpu.memory_space<vmem>>, vector<1x512xf32>,
    return
  }
  func.func @transform_0(%arg0: i32) -> (i32, i32) {
    %c0_i32 = arith.constant 0 : i32
    %c0_i32_0 = arith.constant 0 : i32
    return %c0_i32, %arg0 : i32, i32
  }
  func.func @transform_1(%arg0: i32) -> (i32, i32) {
    %c0_i32 = arith.constant 0 : i32
    %c0_i32_0 = arith.constant 0 : i32
    %c0_i32_1 = arith.constant 0 : i32
    return %c0_i32, %c0_i32_0 : i32, i32
  }
  func.func @transform_2(%arg0: i32) -> (i32, i32) {
    %c0_i32 = arith.constant 0 : i32
    %c0_i32_0 = arith.constant 0 : i32
    %c0_i32_1 = arith.constant 0 : i32
    return %c0_i32, %c0_i32_0 : i32, i32
  }
  func.func @transform_3(%arg0: i32) -> (i32, i32, i32) {
    %c0_i32 = arith.constant 0 : i32
    %c0_i32_0 = arith.constant 0 : i32
    %c0_i32_1 = arith.constant 0 : i32
    %c0_i32_2 = arith.constant 0 : i32
    return %c0_i32, %c0_i32_0, %c0_i32_1 : i32, i32, i32
  }
  func.func @transform_4(%arg0: i32) -> (i32, i32, i32) {
    %c0_i32 = arith.constant 0 : i32
    %c0_i32_0 = arith.constant 0 : i32
    %c0_i32_1 = arith.constant 0 : i32
    %c0_i32_2 = arith.constant 0 : i32
    return %c0_i32, %c0_i32_0, %c0_i32_1 : i32, i32, i32
  }
  func.func @transform_5(%arg0: i32) -> (i32, i32) {
    %c0_i32 = arith.constant 0 : i32
    %c0_i32_0 = arith.constant 0 : i32
    %c0_i32_1 = arith.constant 0 : i32
    return %c0_i32, %c0_i32_0 : i32, i32
  }
  func.func @transform_6(%arg0: i32) -> (i32, i32) {
    %c0_i32 = arith.constant 0 : i32
    %c0_i32_0 = arith.constant 0 : i32
    %c0_i32_1 = arith.constant 0 : i32
    return %c0_i32, %c0_i32_0 : i32, i32
  }
  func.func @transform_7(%arg0: i32) -> (i32, i32) {
    %c0_i32 = arith.constant 0 : i32
    %c0_i32_0 = arith.constant 0 : i32
    return %c0_i32, %arg0 : i32, i32
  }
}

</mosaic_0001>

<llo_original>
// kernel: tpu_custom_call.1
$region0: #{tpu_custom_call.1}
  #allocation0 [shape = 'u32[]', space=smem, size = 0x4, offset = 0x4, fixed_abs, tag = 'smem constant byte address 0x4 - core index']
  #allocation1 [shape = 'u32[72,128]{1,0:T(1,128)}', space=vmem, size = 0x9000, scoped, tag = 'internal scratch']
  #allocation2 [shape = 'f32[1,1]{1,0:T(1,128)S(1)}', space=vmem, size = 0x200, scoped, tag = 'scoped memory for tpu_custom_call.1']
  %s0 = inlined_call_operand.vmem [shape: f32[2,1024], index: 0, kind: input, shape index: {}]
  %s1 = inlined_call_operand.vmem [shape: f32[32,2], index: 1, kind: input, shape index: {}]
  %s2 = inlined_call_operand.vmem [shape: f32[32,1], index: 2, kind: input, shape index: {}]
  %s3 = inlined_call_operand.vmem [shape: f32[3,32,32], index: 3, kind: input, shape index: {}]
  %s4 = inlined_call_operand.vmem [shape: f32[3,32,1], index: 4, kind: input, shape index: {}]
  %s5 = inlined_call_operand.vmem [shape: f32[1,32], index: 5, kind: input, shape index: {}]
  %s6 = inlined_call_operand.<no memory space> [shape: f32[1,1], index: 6, kind: input, shape index: {}]
  %s7 = inlined_call_operand.hbm [shape: f32[1,1024], index: 7, kind: output, shape index: {}]
  %s8 = sld [smem:[#allocation0]]
  $region61: #{tpu_custom_call.1} parent=0
    _
  %s10 = ssub.s32 1, %s8
  %s11 = scalar_select 0, %s10, %s8
  %v12 = vstv %s6
  %13 = vst [vmem:[#allocation2] sm:$0x1] %v12
  $region1: #{tpu_custom_call.1} parent=0
    #allocation3 [shape = 'u8[4096]{0}', space=vmem, size = 0x1000, scoped, tag = 'output window, operand 0']
    #allocation4 [shape = 's32[2]{0}', space=sflag, size = 0x8, scoped, tag = 'scoped memory for tpu_custom_call.1']
    %14 = vsyncpa [#allocation4], 0
    %s15 = scalar_lea.sflag [#allocation4], 1
    %16 = vsyncpa %s15, 0
    loop: start=0, step=1, limit=4
    $region2: #{tpu_custom_call.1} parent=1 // loop_pre_header
      _
    $region3: #{tpu_custom_call.1} parent=1 // loop_header
      %s18 = sphi 0, %s22
      %p19 = scmp.ge.s32.totalorder %s18, 4
      %s28 = sphi 0, %s30
      %s31 = sphi 0, %s28
      %s32 = sphi 0, %s31
      %s48 = sphi 0, %s32
      %s52 = sphi 0, %s52
      %s54 = sphi 0, %s52
      %s55 = sphi 0, %s54
      %s69 = sphi 0, %s55
      %s73 = sphi 0, %s73
      %s75 = sphi 0, %s73
      %s76 = sphi 0, %s75
      %s90 = sphi 0, %s76
      %s94 = sphi 0, %s94
      %s96 = sphi 0, %s94
      %s97 = sphi 0, %s96
      %s111 = sphi 0, %s97
      %s115 = sphi 0, %s115
      %s117 = sphi 0, %s115
      %s118 = sphi 0, %s117
      %s132 = sphi 0, %s118
      %s136 = sphi 0, %s136
      %s138 = sphi 0, %s136
      %s139 = sphi 0, %s138
      %s153 = sphi 0, %s139
      %s157 = sphi 0, %s157
      %s159 = sphi 0, %s157
      %s160 = sphi 0, %s159
      %s174 = sphi 0, %s160
      %s180 = sphi 0, %s182
      %s183 = sphi 0, %s180
      %s184 = sphi 0, %s183
      %s200 = sphi 0, %s184
    $region4: #{tpu_custom_call.1} parent=1 // loop_header_branch
      %21 = sbr.rel (%p19) target = $region8
    $region5: #{tpu_custom_call.1} parent=1 // loop_body
      %s23 = ssub.s32 %s18, 1
      %s24 = ssub.s32 %s18, 2
      %s25 = sadd.s32 %s18, 1
      %s26 = ssub.s32 %s18, %s25
      %p27 = scmp.eq.s32.totalorder %s26, 0
      %s29 = sadd.s32 %s28, 1
      %s30 = scalar_select %p27, %s28, %s29
      %p33 = pneg %p27
      %p34 = scmp.eq.s32.totalorder %s18, 1
      %p35 = por %p33, %p34
      %p36 = scmp.ne.s32.totalorder %s28, %s31
      %p37 = scmp.eq.s32.totalorder %s18, 0
      %p38 = por %p36, %p37
      %p39 = scmp.ne.s32.totalorder %s28, %s31
      %p40 = scmp.eq.s32.totalorder %s23, 1
      %p41 = por %p39, %p40
      %p42 = scmp.ne.s32.totalorder %s31, %s32
      %p43 = scmp.eq.s32.totalorder %s23, 0
      %p44 = por %p42, %p43
      %p45 = scmp.ne.s32.totalorder %s31, %s32
      %p46 = scmp.eq.s32.totalorder %s24, 1
      %p47 = por %p45, %p46
      %p49 = scmp.ne.s32.totalorder %s32, %s48
      %p50 = scmp.eq.s32.totalorder %s24, 0
      %p51 = por %p49, %p50
      %s53 = sadd.s32 %s52, 1
      %p56 = scmp.eq.s32.totalorder %s18, 1
      %p57 = scmp.ne.s32.totalorder %s52, %s54
      %p58 = scmp.eq.s32.totalorder %s18, 0
      %p59 = por %p57, %p58
      %p60 = scmp.ne.s32.totalorder %s52, %s54
      %p61 = scmp.eq.s32.totalorder %s23, 1
      %p62 = por %p60, %p61
      %p63 = scmp.ne.s32.totalorder %s54, %s55
      %p64 = scmp.eq.s32.totalorder %s23, 0
      %p65 = por %p63, %p64
      %p66 = scmp.ne.s32.totalorder %s54, %s55
      %p67 = scmp.eq.s32.totalorder %s24, 1
      %p68 = por %p66, %p67
      %p70 = scmp.ne.s32.totalorder %s55, %s69
      %p71 = scmp.eq.s32.totalorder %s24, 0
      %p72 = por %p70, %p71
      %s74 = sadd.s32 %s73, 1
      %p77 = scmp.eq.s32.totalorder %s18, 1
      %p78 = scmp.ne.s32.totalorder %s73, %s75
      %p79 = scmp.eq.s32.totalorder %s18, 0
      %p80 = por %p78, %p79
      %p81 = scmp.ne.s32.totalorder %s73, %s75
      %p82 = scmp.eq.s32.totalorder %s23, 1
      %p83 = por %p81, %p82
      %p84 = scmp.ne.s32.totalorder %s75, %s76
      %p85 = scmp.eq.s32.totalorder %s23, 0
      %p86 = por %p84, %p85
      %p87 = scmp.ne.s32.totalorder %s75, %s76
      %p88 = scmp.eq.s32.totalorder %s24, 1
      %p89 = por %p87, %p88
      %p91 = scmp.ne.s32.totalorder %s76, %s90
      %p92 = scmp.eq.s32.totalorder %s24, 0
      %p93 = por %p91, %p92
      %s95 = sadd.s32 %s94, 1
      %p98 = scmp.eq.s32.totalorder %s18, 1
      %p99 = scmp.ne.s32.totalorder %s94, %s96
      %p100 = scmp.eq.s32.totalorder %s18, 0
      %p101 = por %p99, %p100
      %p102 = scmp.ne.s32.totalorder %s94, %s96
      %p103 = scmp.eq.s32.totalorder %s23, 1
      %p104 = por %p102, %p103
      %p105 = scmp.ne.s32.totalorder %s96, %s97
      %p106 = scmp.eq.s32.totalorder %s23, 0
      %p107 = por %p105, %p106
      %p108 = scmp.ne.s32.totalorder %s96, %s97
      %p109 = scmp.eq.s32.totalorder %s24, 1
      %p110 = por %p108, %p109
      %p112 = scmp.ne.s32.totalorder %s97, %s111
      %p113 = scmp.eq.s32.totalorder %s24, 0
      %p114 = por %p112, %p113
      %s116 = sadd.s32 %s115, 1
      %p119 = scmp.eq.s32.totalorder %s18, 1
      %p120 = scmp.ne.s32.totalorder %s115, %s117
      %p121 = scmp.eq.s32.totalorder %s18, 0
      %p122 = por %p120, %p121
      %p123 = scmp.ne.s32.totalorder %s115, %s117
      %p124 = scmp.eq.s32.totalorder %s23, 1
      %p125 = por %p123, %p124
      %p126 = scmp.ne.s32.totalorder %s117, %s118
      %p127 = scmp.eq.s32.totalorder %s23, 0
      %p128 = por %p126, %p127
      %p129 = scmp.ne.s32.totalorder %s117, %s118
      %p130 = scmp.eq.s32.totalorder %s24, 1
      %p131 = por %p129, %p130
      %p133 = scmp.ne.s32.totalorder %s118, %s132
      %p134 = scmp.eq.s32.totalorder %s24, 0
      %p135 = por %p133, %p134
      %s137 = sadd.s32 %s136, 1
      %p140 = scmp.eq.s32.totalorder %s18, 1
      %p141 = scmp.ne.s32.totalorder %s136, %s138
      %p142 = scmp.eq.s32.totalorder %s18, 0
      %p143 = por %p141, %p142
      %p144 = scmp.ne.s32.totalorder %s136, %s138
      %p145 = scmp.eq.s32.totalorder %s23, 1
      %p146 = por %p144, %p145
      %p147 = scmp.ne.s32.totalorder %s138, %s139
      %p148 = scmp.eq.s32.totalorder %s23, 0
      %p149 = por %p147, %p148
      %p150 = scmp.ne.s32.totalorder %s138, %s139
      %p151 = scmp.eq.s32.totalorder %s24, 1
      %p152 = por %p150, %p151
      %p154 = scmp.ne.s32.totalorder %s139, %s153
      %p155 = scmp.eq.s32.totalorder %s24, 0
      %p156 = por %p154, %p155
      %s158 = sadd.s32 %s157, 1
      %p161 = scmp.eq.s32.totalorder %s18, 1
      %p162 = scmp.ne.s32.totalorder %s157, %s159
      %p163 = scmp.eq.s32.totalorder %s18, 0
      %p164 = por %p162, %p163
      %p165 = scmp.ne.s32.totalorder %s157, %s159
      %p166 = scmp.eq.s32.totalorder %s23, 1
      %p167 = por %p165, %p166
      %p168 = scmp.ne.s32.totalorder %s159, %s160
      %p169 = scmp.eq.s32.totalorder %s23, 0
      %p170 = por %p168, %p169
      %p171 = scmp.ne.s32.totalorder %s159, %s160
      %p172 = scmp.eq.s32.totalorder %s24, 1
      %p173 = por %p171, %p172
      %p175 = scmp.ne.s32.totalorder %s160, %s174
      %p176 = scmp.eq.s32.totalorder %s24, 0
      %p177 = por %p175, %p176
      %s178 = ssub.s32 %s18, %s25
      %p179 = scmp.eq.s32.totalorder %s178, 0
      %s181 = sadd.s32 %s180, 1
      %s182 = scalar_select %p179, %s180, %s181
      %p185 = pneg %p179
      %p186 = scmp.eq.s32.totalorder %s18, 1
      %p187 = por %p185, %p186
      %p188 = scmp.ne.s32.totalorder %s180, %s183
      %p189 = scmp.eq.s32.totalorder %s18, 0
      %p190 = por %p188, %p189
      %p191 = scmp.ne.s32.totalorder %s180, %s183
      %p192 = scmp.eq.s32.totalorder %s23, 1
      %p193 = por %p191, %p192
      %p194 = scmp.ne.s32.totalorder %s183, %s184
      %p195 = scmp.eq.s32.totalorder %s23, 0
      %p196 = por %p194, %p195
      %p197 = scmp.ne.s32.totalorder %s183, %s184
      %p198 = scmp.eq.s32.totalorder %s24, 1
      %p199 = por %p197, %p198
      %p201 = scmp.ne.s32.totalorder %s184, %s200
      %p202 = scmp.eq.s32.totalorder %s24, 0
      %p203 = por %p201, %p202
      %p204 = scmp.le.s32.totalorder 1, %s18
      %p205 = scmp.lt.s32.totalorder %s18, 3
      %p206 = pnand %p204, %p205
      %p207 = pneg %p206
      // Predicated region
      $region9: #{tpu_custom_call.1} parent=5 // pred_check
        _
      $region10: #{tpu_custom_call.1} parent=5 // pred_check_branch
        %209 = sbr.rel (%p206) target = $region12
      $region11: #{tpu_custom_call.1} parent=5 // pred_region
        %s210 = ssub.s32 %s18, 1
        // Predicated region
        $region13: #{tpu_custom_call.1} parent=11 // pred_check
          %p211 = pneg %p65
        $region14: #{tpu_custom_call.1} parent=11 // pred_check_branch
          %213 = sbr.rel (%p211) target = $region16
        $region15: #{tpu_custom_call.1} parent=11 // pred_region
          _
        $region16: #{tpu_custom_call.1} parent=11 // pred_fallthru
          _
        // Predicated region
        $region17: #{tpu_custom_call.1} parent=11 // pred_check
          %p214 = pneg %p86
        $region18: #{tpu_custom_call.1} parent=11 // pred_check_branch
          %216 = sbr.rel (%p214) target = $region20
        $region19: #{tpu_custom_call.1} parent=11 // pred_region
          _
        $region20: #{tpu_custom_call.1} parent=11 // pred_fallthru
          _
        // Predicated region
        $region21: #{tpu_custom_call.1} parent=11 // pred_check
          %p217 = pneg %p107
        $region22: #{tpu_custom_call.1} parent=11 // pred_check_branch
          %219 = sbr.rel (%p217) target = $region24
        $region23: #{tpu_custom_call.1} parent=11 // pred_region
          _
        $region24: #{tpu_custom_call.1} parent=11 // pred_fallthru
          _
        // Predicated region
        $region25: #{tpu_custom_call.1} parent=11 // pred_check
          %p220 = pneg %p128
        $region26: #{tpu_custom_call.1} parent=11 // pred_check_branch
          %222 = sbr.rel (%p220) target = $region28
        $region27: #{tpu_custom_call.1} parent=11 // pred_region
          _
        $region28: #{tpu_custom_call.1} parent=11 // pred_fallthru
          _
        // Predicated region
        $region29: #{tpu_custom_call.1} parent=11 // pred_check
          %p223 = pneg %p149
        $region30: #{tpu_custom_call.1} parent=11 // pred_check_branch
          %225 = sbr.rel (%p223) target = $region32
        $region31: #{tpu_custom_call.1} parent=11 // pred_region
          _
        $region32: #{tpu_custom_call.1} parent=11 // pred_fallthru
          _
        // Predicated region
        $region33: #{tpu_custom_call.1} parent=11 // pred_check
          %p226 = pneg %p170
        $region34: #{tpu_custom_call.1} parent=11 // pred_check_branch
          %228 = sbr.rel (%p226) target = $region36
        $region35: #{tpu_custom_call.1} parent=11 // pred_region
          _
        $region36: #{tpu_custom_call.1} parent=11 // pred_fallthru
          _
      $region12: #{tpu_custom_call.1} parent=5 // pred_fallthru
        _
      %p229 = scmp.lt.s32.totalorder %s18, 2
      // Predicated region
      $region37: #{tpu_custom_call.1} parent=5 // pred_check
        %p230 = pneg %p229
      $region38: #{tpu_custom_call.1} parent=5 // pred_check_branch
        %232 = sbr.rel (%p230) target = $region40
      $region39: #{tpu_custom_call.1} parent=5 // pred_region
        // Predicated region
        $region41: #{tpu_custom_call.1} parent=39 // pred_check
          %p233 = pneg %p38
        $region42: #{tpu_custom_call.1} parent=39 // pred_check_branch
          %235 = sbr.rel (%p233) target = $region44
        $region43: #{tpu_custom_call.1} parent=39 // pred_region
          %s236 = smul.u32 4, %s18
          %p237 = scmp.lt.s32.totalorder %s236, 7
          %s238 = scalar_select %p237, %s236, 7
          %s239 = smul.addr %s238, 2
          %s240 = scalar_lea.vmem %s0, %s239
          %s241 = smul.u32 4, %s18
        $region44: #{tpu_custom_call.1} parent=39 // pred_fallthru
          _
      $region40: #{tpu_custom_call.1} parent=5 // pred_fallthru
        _
      %p242 = scmp.le.s32.totalorder 1, %s18
      %p243 = scmp.lt.s32.totalorder %s18, 3
      %p244 = pnand %p242, %p243
      %p245 = pneg %p244
      // Predicated region
      $region45: #{tpu_custom_call.1} parent=5 // pred_check
        _
      $region46: #{tpu_custom_call.1} parent=5 // pred_check_branch
        %247 = sbr.rel (%p244) target = $region48
      $region47: #{tpu_custom_call.1} parent=5 // pred_region
        %s248 = ssub.s32 %s18, 1
        %s249 = smul.u32 4, %s23
        %p250 = scmp.lt.s32.totalorder %s249, 7
        %s251 = scalar_select %p250, %s249, 7
        %s252 = smul.addr %s251, 2
        %s253 = scalar_lea.vmem %s0, %s252
        %p254 = pneg %p44
        %p255 = pneg %p41
        %p256 = pneg %p65
        %p257 = pneg %p62
        %p258 = pneg %p86
        %p259 = pneg %p83
        %p260 = pneg %p107
        %p261 = pneg %p104
        %p262 = pneg %p128
        %p263 = pneg %p125
        %p264 = pneg %p149
        %p265 = pneg %p146
        %p266 = pneg %p170
        %p267 = pneg %p167
        %p268 = pneg %p196
        %p269 = pneg %p193
        %s270 = sand.u32 %s183, 1
        %s271 = scalar_lea.sflag [#allocation4], %s270
        %s272 = sand.u32 %s183, 1
        %s273 = smul.addr %s272, 4
        %s274 = scalar_lea.vmem [#allocation3], %s273
        %s275 = smul.u32 4, %s23
        %p276 = scmp.lt.s32.totalorder %s275, 7
        %s277 = scalar_select %p276, %s275, 7
        %s278 = smul.addr %s277, 2
        %s279 = scalar_lea.vmem %s0, %s278
        %s280 = smul.u32 4, %s23
        %s281 = smul.u32 4, %s23
        %v282 = vld [vmem:[%s279] sm:$0xff]
        %v283 = vld [vmem:[%s1] sm:$0xff]
        %v284 = vld [vmem:[%s1 + $0x8] sm:$0xff]
        %v285 = vld [vmem:[%s1 + $0x10] sm:$0xff]
        %v286 = vld [vmem:[%s1 + $0x18] sm:$0xff]
        %v287 = vld [vmem:[%s2] sm:$0xff]
        %v288 = vld [vmem:[%s2 + $0x8] sm:$0xff]
        %v289 = vld [vmem:[%s2 + $0x10] sm:$0xff]
        %v290 = vld [vmem:[%s2 + $0x18] sm:$0xff]
        %292 = vset.pattern.permute.xlu0 0
        %293 = vperm.xlu0 %292, %v287
        %v294 = vpop.permute.xlu0 %293
        %297 = vset.pattern.permute.xlu0 0
        %298 = vperm.xlu0 %297, %v288
        %v299 = vpop.permute.xlu0 %298
        %302 = vset.pattern.permute.xlu0 0
        %303 = vperm.xlu0 %302, %v289
        %v304 = vpop.permute.xlu0 %303
        %307 = vset.pattern.permute.xlu0 0
        %308 = vperm.xlu0 %307, %v290
        %v309 = vpop.permute.xlu0 %308
        %312 = vst [vmem:[#allocation1] ss:$4 sm:$0xff] %v282
        %v313 = vld.sshfl [vmem:[#allocation1] sm:$0xff pattern:$0x73625140]
        %v314 = vld.sshfl [vmem:[#allocation1 + $0x8] sm:$0xff pattern:$0x73625140]
        %v315 = vld.sshfl [vmem:[#allocation1 + $0x10] sm:$0xff pattern:$0x73625140]
        %v316 = vld.sshfl [vmem:[#allocation1 + $0x18] sm:$0xff pattern:$0x73625140]
        %vm317 = vcmask 15360
        %v319 = vsel %vm317, %v283, 0
        %v322 = vsel %vm317, %v284, 0
        %v325 = vsel %vm317, %v285, 0
        %v328 = vsel %vm317, %v286, 0
        %vm330 = vcmask 1041408
        %v331 = vsel %vm330, %v313, 0
        %v333 = vsel %vm330, %v314, 0
        %v335 = vsel %vm330, %v315, 0
        %v337 = vsel %vm330, %v316, 0
        %339 = vmatpush.msra.mxu0 0.0
        %340 = vmatpush.msra.mxu0 0.0
        %341 = vmatpush.msra.mxu0 0.0
        %342 = vmatpush.msra.mxu0 0.0
        %343 = vmatpush.msra.mxu0 0.0
        %344 = vmatpush.msra.mxu0 0.0
        %345 = vmatpush.msra.mxu0 0.0
        %346 = vmatpush.msra.mxu0 0.0
        %347 = vmatpush.msra.mxu0 0.0
        %348 = vmatpush.msra.mxu0 0.0
        %349 = vmatpush.msra.mxu0 0.0
        %350 = vmatpush.msra.mxu0 0.0
        %351 = vmatpush.msra.mxu0 0.0
        %352 = vmatpush.msra.mxu0 0.0
        %353 = vmatpush.msra.mxu0 0.0
        %354 = vmatpush.msra.mxu0 %v331
        %355 = vmatmul.f32.gmra.mxu0 %v319
        %v356 = vpop.f32.mrf.mxu0
        %v357 = vadd.f32 %v294, %v356
        %358 = vmatmul.f32.gmra.mxu0 %v322
        %v359 = vpop.f32.mrf.mxu0
        %v360 = vadd.f32 %v299, %v359
        %361 = vmatmul.f32.gmra.mxu0 %v325
        %v362 = vpop.f32.mrf.mxu0
        %v363 = vadd.f32 %v304, %v362
        %364 = vmatmul.f32.gmra.mxu0 %v328
        %v365 = vpop.f32.mrf.mxu0
        %v366 = vadd.f32 %v309, %v365
        %367 = vdwg.mxu0
        %368 = vmatpush.msra.mxu0 0.0
        %369 = vmatpush.msra.mxu0 0.0
        %370 = vmatpush.msra.mxu0 0.0
        %371 = vmatpush.msra.mxu0 0.0
        %372 = vmatpush.msra.mxu0 0.0
        %373 = vmatpush.msra.mxu0 0.0
        %374 = vmatpush.msra.mxu0 0.0
        %375 = vmatpush.msra.mxu0 0.0
        %376 = vmatpush.msra.mxu0 0.0
        %377 = vmatpush.msra.mxu0 0.0
        %378 = vmatpush.msra.mxu0 0.0
        %379 = vmatpush.msra.mxu0 0.0
        %380 = vmatpush.msra.mxu0 0.0
        %381 = vmatpush.msra.mxu0 0.0
        %382 = vmatpush.msra.mxu0 0.0
        %383 = vmatpush.msra.mxu0 %v333
        %384 = vmatmul.f32.gmra.mxu0 %v319
        %v385 = vpop.f32.mrf.mxu0
        %v386 = vadd.f32 %v294, %v385
        %387 = vmatmul.f32.gmra.mxu0 %v322
        %v388 = vpop.f32.mrf.mxu0
        %v389 = vadd.f32 %v299, %v388
        %390 = vmatmul.f32.gmra.mxu0 %v325
        %v391 = vpop.f32.mrf.mxu0
        %v392 = vadd.f32 %v304, %v391
        %393 = vmatmul.f32.gmra.mxu0 %v328
        %v394 = vpop.f32.mrf.mxu0
        %v395 = vadd.f32 %v309, %v394
        %396 = vdwg.mxu0
        %397 = vmatpush.msra.mxu0 0.0
        %398 = vmatpush.msra.mxu0 0.0
        %399 = vmatpush.msra.mxu0 0.0
        %400 = vmatpush.msra.mxu0 0.0
        %401 = vmatpush.msra.mxu0 0.0
        %402 = vmatpush.msra.mxu0 0.0
        %403 = vmatpush.msra.mxu0 0.0
        %404 = vmatpush.msra.mxu0 0.0
        %405 = vmatpush.msra.mxu0 0.0
        %406 = vmatpush.msra.mxu0 0.0
        %407 = vmatpush.msra.mxu0 0.0
        %408 = vmatpush.msra.mxu0 0.0
        %409 = vmatpush.msra.mxu0 0.0
        %410 = vmatpush.msra.mxu0 0.0
        %411 = vmatpush.msra.mxu0 0.0
        %412 = vmatpush.msra.mxu0 %v335
        %413 = vmatmul.f32.gmra.mxu0 %v319
        %v414 = vpop.f32.mrf.mxu0
        %v415 = vadd.f32 %v294, %v414
        %416 = vmatmul.f32.gmra.mxu0 %v322
        %v417 = vpop.f32.mrf.mxu0
        %v418 = vadd.f32 %v299, %v417
        %419 = vmatmul.f32.gmra.mxu0 %v325
        %v420 = vpop.f32.mrf.mxu0
        %v421 = vadd.f32 %v304, %v420
        %422 = vmatmul.f32.gmra.mxu0 %v328
        %v423 = vpop.f32.mrf.mxu0
        %v424 = vadd.f32 %v309, %v423
        %425 = vdwg.mxu0
        %426 = vmatpush.msra.mxu0 0.0
        %427 = vmatpush.msra.mxu0 0.0
        %428 = vmatpush.msra.mxu0 0.0
        %429 = vmatpush.msra.mxu0 0.0
        %430 = vmatpush.msra.mxu0 0.0
        %431 = vmatpush.msra.mxu0 0.0
        %432 = vmatpush.msra.mxu0 0.0
        %433 = vmatpush.msra.mxu0 0.0
        %434 = vmatpush.msra.mxu0 0.0
        %435 = vmatpush.msra.mxu0 0.0
        %436 = vmatpush.msra.mxu0 0.0
        %437 = vmatpush.msra.mxu0 0.0
        %438 = vmatpush.msra.mxu0 0.0
        %439 = vmatpush.msra.mxu0 0.0
        %440 = vmatpush.msra.mxu0 0.0
        %441 = vmatpush.msra.mxu0 %v337
        %442 = vmatmul.f32.gmra.mxu0 %v319
        %v443 = vpop.f32.mrf.mxu0
        %v444 = vadd.f32 %v294, %v443
        %445 = vmatmul.f32.gmra.mxu0 %v322
        %v446 = vpop.f32.mrf.mxu0
        %v447 = vadd.f32 %v299, %v446
        %448 = vmatmul.f32.gmra.mxu0 %v325
        %v449 = vpop.f32.mrf.mxu0
        %v450 = vadd.f32 %v304, %v449
        %451 = vmatmul.f32.gmra.mxu0 %v328
        %v452 = vpop.f32.mrf.mxu0
        %v453 = vadd.f32 %v309, %v452
        %454 = vdwg.mxu0
        %v455 = vld [vmem:[%s3] sm:$0xff]
        %v456 = vld [vmem:[%s3 + $0x8] sm:$0xff]
        %v457 = vld [vmem:[%s3 + $0x10] sm:$0xff]
        %v458 = vld [vmem:[%s3 + $0x18] sm:$0xff]
        %v459 = vld [vmem:[%s4] sm:$0xff]
        %v460 = vld [vmem:[%s4 + $0x8] sm:$0xff]
        %v461 = vld [vmem:[%s4 + $0x10] sm:$0xff]
        %v462 = vld [vmem:[%s4 + $0x18] sm:$0xff]
        %464 = vset.pattern.permute.xlu0 0
        %465 = vperm.xlu0 %464, %v459
        %v466 = vpop.permute.xlu0 %465
        %469 = vset.pattern.permute.xlu0 0
        %470 = vperm.xlu0 %469, %v460
        %v471 = vpop.permute.xlu0 %470
        %474 = vset.pattern.permute.xlu0 0
        %475 = vperm.xlu0 %474, %v461
        %v476 = vpop.permute.xlu0 %475
        %479 = vset.pattern.permute.xlu0 0
        %480 = vperm.xlu0 %479, %v462
        %v481 = vpop.permute.xlu0 %480
        %vm483 = vcmask 261120
        %v485 = vsel %vm483, %v455, 0
        %v488 = vsel %vm483, %v456, 0
        %v491 = vsel %vm483, %v457, 0
        %v494 = vsel %vm483, %v458, 0
        %496 = vmatpush.msra.mxu0 0.0
        %497 = vmatpush.msra.mxu0 0.0
        %498 = vmatpush.msra.mxu0 0.0
        %499 = vmatpush.msra.mxu0 0.0
        %500 = vmatpush.msra.mxu0 0.0
        %501 = vmatpush.msra.mxu0 0.0
        %502 = vmatpush.msra.mxu0 0.0
        %503 = vmatpush.msra.mxu0 0.0
        %504 = vmatpush.msra.mxu0 0.0
        %505 = vmatpush.msra.mxu0 0.0
        %506 = vmatpush.msra.mxu0 0.0
        %507 = vmatpush.msra.mxu0 0.0
        %508 = vmatpush.msra.mxu0 %v366
        %509 = vmatpush.msra.mxu0 %v363
        %510 = vmatpush.msra.mxu0 %v360
        %511 = vmatpush.msra.mxu0 %v357
        %512 = vmatmul.f32.gmra.mxu0 %v485
        %v513 = vpop.f32.mrf.mxu0
        %v514 = vadd.f32 %v466, %v513
        %515 = vmatmul.f32.gmra.mxu0 %v488
        %v516 = vpop.f32.mrf.mxu0
        %v517 = vadd.f32 %v471, %v516
        %518 = vmatmul.f32.gmra.mxu0 %v491
        %v519 = vpop.f32.mrf.mxu0
        %v520 = vadd.f32 %v476, %v519
        %521 = vmatmul.f32.gmra.mxu0 %v494
        %v522 = vpop.f32.mrf.mxu0
        %v523 = vadd.f32 %v481, %v522
        %524 = vdwg.mxu0
        %525 = vmatpush.msra.mxu0 0.0
        %526 = vmatpush.msra.mxu0 0.0
        %527 = vmatpush.msra.mxu0 0.0
        %528 = vmatpush.msra.mxu0 0.0
        %529 = vmatpush.msra.mxu0 0.0
        %530 = vmatpush.msra.mxu0 0.0
        %531 = vmatpush.msra.mxu0 0.0
        %532 = vmatpush.msra.mxu0 0.0
        %533 = vmatpush.msra.mxu0 0.0
        %534 = vmatpush.msra.mxu0 0.0
        %535 = vmatpush.msra.mxu0 0.0
        %536 = vmatpush.msra.mxu0 0.0
        %537 = vmatpush.msra.mxu0 %v395
        %538 = vmatpush.msra.mxu0 %v392
        %539 = vmatpush.msra.mxu0 %v389
        %540 = vmatpush.msra.mxu0 %v386
        %541 = vmatmul.f32.gmra.mxu0 %v485
        %v542 = vpop.f32.mrf.mxu0
        %v543 = vadd.f32 %v466, %v542
        %544 = vmatmul.f32.gmra.mxu0 %v488
        %v545 = vpop.f32.mrf.mxu0
        %v546 = vadd.f32 %v471, %v545
        %547 = vmatmul.f32.gmra.mxu0 %v491
        %v548 = vpop.f32.mrf.mxu0
        %v549 = vadd.f32 %v476, %v548
        %550 = vmatmul.f32.gmra.mxu0 %v494
        %v551 = vpop.f32.mrf.mxu0
        %v552 = vadd.f32 %v481, %v551
        %553 = vdwg.mxu0
        %554 = vmatpush.msra.mxu0 0.0
        %555 = vmatpush.msra.mxu0 0.0
        %556 = vmatpush.msra.mxu0 0.0
        %557 = vmatpush.msra.mxu0 0.0
        %558 = vmatpush.msra.mxu0 0.0
        %559 = vmatpush.msra.mxu0 0.0
        %560 = vmatpush.msra.mxu0 0.0
        %561 = vmatpush.msra.mxu0 0.0
        %562 = vmatpush.msra.mxu0 0.0
        %563 = vmatpush.msra.mxu0 0.0
        %564 = vmatpush.msra.mxu0 0.0
        %565 = vmatpush.msra.mxu0 0.0
        %566 = vmatpush.msra.mxu0 %v424
        %567 = vmatpush.msra.mxu0 %v421
        %568 = vmatpush.msra.mxu0 %v418
        %569 = vmatpush.msra.mxu0 %v415
        %570 = vmatmul.f32.gmra.mxu0 %v485
        %v571 = vpop.f32.mrf.mxu0
        %v572 = vadd.f32 %v466, %v571
        %573 = vmatmul.f32.gmra.mxu0 %v488
        %v574 = vpop.f32.mrf.mxu0
        %v575 = vadd.f32 %v471, %v574
        %576 = vmatmul.f32.gmra.mxu0 %v491
        %v577 = vpop.f32.mrf.mxu0
        %v578 = vadd.f32 %v476, %v577
        %579 = vmatmul.f32.gmra.mxu0 %v494
        %v580 = vpop.f32.mrf.mxu0
        %v581 = vadd.f32 %v481, %v580
        %582 = vdwg.mxu0
        %583 = vmatpush.msra.mxu0 0.0
        %584 = vmatpush.msra.mxu0 0.0
        %585 = vmatpush.msra.mxu0 0.0
        %586 = vmatpush.msra.mxu0 0.0
        %587 = vmatpush.msra.mxu0 0.0
        %588 = vmatpush.msra.mxu0 0.0
        %589 = vmatpush.msra.mxu0 0.0
        %590 = vmatpush.msra.mxu0 0.0
        %591 = vmatpush.msra.mxu0 0.0
        %592 = vmatpush.msra.mxu0 0.0
        %593 = vmatpush.msra.mxu0 0.0
        %594 = vmatpush.msra.mxu0 0.0
        %595 = vmatpush.msra.mxu0 %v453
        %596 = vmatpush.msra.mxu0 %v450
        %597 = vmatpush.msra.mxu0 %v447
        %598 = vmatpush.msra.mxu0 %v444
        %599 = vmatmul.f32.gmra.mxu0 %v485
        %v600 = vpop.f32.mrf.mxu0
        %v601 = vadd.f32 %v466, %v600
        %602 = vmatmul.f32.gmra.mxu0 %v488
        %v603 = vpop.f32.mrf.mxu0
        %v604 = vadd.f32 %v471, %v603
        %605 = vmatmul.f32.gmra.mxu0 %v491
        %v606 = vpop.f32.mrf.mxu0
        %v607 = vadd.f32 %v476, %v606
        %608 = vmatmul.f32.gmra.mxu0 %v494
        %v609 = vpop.f32.mrf.mxu0
        %v610 = vadd.f32 %v481, %v609
        %611 = vdwg.mxu0
        %v612 = vtanh.pop %v514
        %v613 = vtanh.pop %v543
        %v614 = vtanh.pop %v572
        %v615 = vtanh.pop %v601
        %v616 = vtanh.pop %v517
        %v617 = vtanh.pop %v546
        %v618 = vtanh.pop %v575
        %v619 = vtanh.pop %v604
        %v620 = vtanh.pop %v520
        %v621 = vtanh.pop %v549
        %v622 = vtanh.pop %v578
        %v623 = vtanh.pop %v607
        %v624 = vtanh.pop %v523
        %v625 = vtanh.pop %v552
        %v626 = vtanh.pop %v581
        %v627 = vtanh.pop %v610
        %s628 = scalar_lea.vmem %s3, 32
        %v629 = vld [vmem:[%s628] sm:$0xff]
        %v630 = vld [vmem:[%s628 + $0x8] sm:$0xff]
        %v631 = vld [vmem:[%s628 + $0x10] sm:$0xff]
        %v632 = vld [vmem:[%s628 + $0x18] sm:$0xff]
        %s633 = scalar_lea.vmem %s4, 32
        %v634 = vld [vmem:[%s633] sm:$0xff]
        %v635 = vld [vmem:[%s633 + $0x8] sm:$0xff]
        %v636 = vld [vmem:[%s633 + $0x10] sm:$0xff]
        %v637 = vld [vmem:[%s633 + $0x18] sm:$0xff]
        %639 = vset.pattern.permute.xlu0 0
        %640 = vperm.xlu0 %639, %v634
        %v641 = vpop.permute.xlu0 %640
        %644 = vset.pattern.permute.xlu0 0
        %645 = vperm.xlu0 %644, %v635
        %v646 = vpop.permute.xlu0 %645
        %649 = vset.pattern.permute.xlu0 0
        %650 = vperm.xlu0 %649, %v636
        %v651 = vpop.permute.xlu0 %650
        %654 = vset.pattern.permute.xlu0 0
        %655 = vperm.xlu0 %654, %v637
        %v656 = vpop.permute.xlu0 %655
        %v659 = vsel %vm483, %v629, 0
        %v662 = vsel %vm483, %v630, 0
        %v665 = vsel %vm483, %v631, 0
        %v668 = vsel %vm483, %v632, 0
        %670 = vmatpush.msra.mxu0 0.0
        %671 = vmatpush.msra.mxu0 0.0
        %672 = vmatpush.msra.mxu0 0.0
        %673 = vmatpush.msra.mxu0 0.0
        %674 = vmatpush.msra.mxu0 0.0
        %675 = vmatpush.msra.mxu0 0.0
        %676 = vmatpush.msra.mxu0 0.0
        %677 = vmatpush.msra.mxu0 0.0
        %678 = vmatpush.msra.mxu0 0.0
        %679 = vmatpush.msra.mxu0 0.0
        %680 = vmatpush.msra.mxu0 0.0
        %681 = vmatpush.msra.mxu0 0.0
        %682 = vmatpush.msra.mxu0 %v624
        %683 = vmatpush.msra.mxu0 %v620
        %684 = vmatpush.msra.mxu0 %v616
        %685 = vmatpush.msra.mxu0 %v612
        %686 = vmatmul.f32.gmra.mxu0 %v659
        %v687 = vpop.f32.mrf.mxu0
        %v688 = vadd.f32 %v641, %v687
        %689 = vmatmul.f32.gmra.mxu0 %v662
        %v690 = vpop.f32.mrf.mxu0
        %v691 = vadd.f32 %v646, %v690
        %692 = vmatmul.f32.gmra.mxu0 %v665
        %v693 = vpop.f32.mrf.mxu0
        %v694 = vadd.f32 %v651, %v693
        %695 = vmatmul.f32.gmra.mxu0 %v668
        %v696 = vpop.f32.mrf.mxu0
        %v697 = vadd.f32 %v656, %v696
        %698 = vdwg.mxu0
        %699 = vmatpush.msra.mxu0 0.0
        %700 = vmatpush.msra.mxu0 0.0
        %701 = vmatpush.msra.mxu0 0.0
        %702 = vmatpush.msra.mxu0 0.0
        %703 = vmatpush.msra.mxu0 0.0
        %704 = vmatpush.msra.mxu0 0.0
        %705 = vmatpush.msra.mxu0 0.0
        %706 = vmatpush.msra.mxu0 0.0
        %707 = vmatpush.msra.mxu0 0.0
        %708 = vmatpush.msra.mxu0 0.0
        %709 = vmatpush.msra.mxu0 0.0
        %710 = vmatpush.msra.mxu0 0.0
        %711 = vmatpush.msra.mxu0 %v625
        %712 = vmatpush.msra.mxu0 %v621
        %713 = vmatpush.msra.mxu0 %v617
        %714 = vmatpush.msra.mxu0 %v613
        %715 = vmatmul.f32.gmra.mxu0 %v659
        %v716 = vpop.f32.mrf.mxu0
        %v717 = vadd.f32 %v641, %v716
        %718 = vmatmul.f32.gmra.mxu0 %v662
        %v719 = vpop.f32.mrf.mxu0
        %v720 = vadd.f32 %v646, %v719
        %721 = vmatmul.f32.gmra.mxu0 %v665
        %v722 = vpop.f32.mrf.mxu0
        %v723 = vadd.f32 %v651, %v722
        %724 = vmatmul.f32.gmra.mxu0 %v668
        %v725 = vpop.f32.mrf.mxu0
        %v726 = vadd.f32 %v656, %v725
        %727 = vdwg.mxu0
        %728 = vmatpush.msra.mxu0 0.0
        %729 = vmatpush.msra.mxu0 0.0
        %730 = vmatpush.msra.mxu0 0.0
        %731 = vmatpush.msra.mxu0 0.0
        %732 = vmatpush.msra.mxu0 0.0
        %733 = vmatpush.msra.mxu0 0.0
        %734 = vmatpush.msra.mxu0 0.0
        %735 = vmatpush.msra.mxu0 0.0
        %736 = vmatpush.msra.mxu0 0.0
        %737 = vmatpush.msra.mxu0 0.0
        %738 = vmatpush.msra.mxu0 0.0
        %739 = vmatpush.msra.mxu0 0.0
        %740 = vmatpush.msra.mxu0 %v626
        %741 = vmatpush.msra.mxu0 %v622
        %742 = vmatpush.msra.mxu0 %v618
        %743 = vmatpush.msra.mxu0 %v614
        %744 = vmatmul.f32.gmra.mxu0 %v659
        %v745 = vpop.f32.mrf.mxu0
        %v746 = vadd.f32 %v641, %v745
        %747 = vmatmul.f32.gmra.mxu0 %v662
        %v748 = vpop.f32.mrf.mxu0
        %v749 = vadd.f32 %v646, %v748
        %750 = vmatmul.f32.gmra.mxu0 %v665
        %v751 = vpop.f32.mrf.mxu0
        %v752 = vadd.f32 %v651, %v751
        %753 = vmatmul.f32.gmra.mxu0 %v668
        %v754 = vpop.f32.mrf.mxu0
        %v755 = vadd.f32 %v656, %v754
        %756 = vdwg.mxu0
        %757 = vmatpush.msra.mxu0 0.0
        %758 = vmatpush.msra.mxu0 0.0
        %759 = vmatpush.msra.mxu0 0.0
        %760 = vmatpush.msra.mxu0 0.0
        %761 = vmatpush.msra.mxu0 0.0
        %762 = vmatpush.msra.mxu0 0.0
        %763 = vmatpush.msra.mxu0 0.0
        %764 = vmatpush.msra.mxu0 0.0
        %765 = vmatpush.msra.mxu0 0.0
        %766 = vmatpush.msra.mxu0 0.0
        %767 = vmatpush.msra.mxu0 0.0
        %768 = vmatpush.msra.mxu0 0.0
        %769 = vmatpush.msra.mxu0 %v627
        %770 = vmatpush.msra.mxu0 %v623
        %771 = vmatpush.msra.mxu0 %v619
        %772 = vmatpush.msra.mxu0 %v615
        %773 = vmatmul.f32.gmra.mxu0 %v659
        %v774 = vpop.f32.mrf.mxu0
        %v775 = vadd.f32 %v641, %v774
        %776 = vmatmul.f32.gmra.mxu0 %v662
        %v777 = vpop.f32.mrf.mxu0
        %v778 = vadd.f32 %v646, %v777
        %779 = vmatmul.f32.gmra.mxu0 %v665
        %v780 = vpop.f32.mrf.mxu0
        %v781 = vadd.f32 %v651, %v780
        %782 = vmatmul.f32.gmra.mxu0 %v668
        %v783 = vpop.f32.mrf.mxu0
        %v784 = vadd.f32 %v656, %v783
        %785 = vdwg.mxu0
        %v786 = vtanh.pop %v688
        %v787 = vtanh.pop %v717
        %v788 = vtanh.pop %v746
        %v789 = vtanh.pop %v775
        %v790 = vtanh.pop %v691
        %v791 = vtanh.pop %v720
        %v792 = vtanh.pop %v749
        %v793 = vtanh.pop %v778
        %v794 = vtanh.pop %v694
        %v795 = vtanh.pop %v723
        %v796 = vtanh.pop %v752
        %v797 = vtanh.pop %v781
        %v798 = vtanh.pop %v697
        %v799 = vtanh.pop %v726
        %v800 = vtanh.pop %v755
        %v801 = vtanh.pop %v784
        %s802 = scalar_lea.vmem %s3, 64
        %v803 = vld [vmem:[%s802] sm:$0xff]
        %v804 = vld [vmem:[%s802 + $0x8] sm:$0xff]
        %v805 = vld [vmem:[%s802 + $0x10] sm:$0xff]
        %v806 = vld [vmem:[%s802 + $0x18] sm:$0xff]
        %s807 = scalar_lea.vmem %s4, 64
        %v808 = vld [vmem:[%s807] sm:$0xff]
        %v809 = vld [vmem:[%s807 + $0x8] sm:$0xff]
        %v810 = vld [vmem:[%s807 + $0x10] sm:$0xff]
        %v811 = vld [vmem:[%s807 + $0x18] sm:$0xff]
        %813 = vset.pattern.permute.xlu0 0
        %814 = vperm.xlu0 %813, %v808
        %v815 = vpop.permute.xlu0 %814
        %818 = vset.pattern.permute.xlu0 0
        %819 = vperm.xlu0 %818, %v809
        %v820 = vpop.permute.xlu0 %819
        %823 = vset.pattern.permute.xlu0 0
        %824 = vperm.xlu0 %823, %v810
        %v825 = vpop.permute.xlu0 %824
        %828 = vset.pattern.permute.xlu0 0
        %829 = vperm.xlu0 %828, %v811
        %v830 = vpop.permute.xlu0 %829
        %v833 = vsel %vm483, %v803, 0
        %v836 = vsel %vm483, %v804, 0
        %v839 = vsel %vm483, %v805, 0
        %v842 = vsel %vm483, %v806, 0
        %844 = vmatpush.msra.mxu0 0.0
        %845 = vmatpush.msra.mxu0 0.0
        %846 = vmatpush.msra.mxu0 0.0
        %847 = vmatpush.msra.mxu0 0.0
        %848 = vmatpush.msra.mxu0 0.0
        %849 = vmatpush.msra.mxu0 0.0
        %850 = vmatpush.msra.mxu0 0.0
        %851 = vmatpush.msra.mxu0 0.0
        %852 = vmatpush.msra.mxu0 0.0
        %853 = vmatpush.msra.mxu0 0.0
        %854 = vmatpush.msra.mxu0 0.0
        %855 = vmatpush.msra.mxu0 0.0
        %856 = vmatpush.msra.mxu0 %v798
        %857 = vmatpush.msra.mxu0 %v794
        %858 = vmatpush.msra.mxu0 %v790
        %859 = vmatpush.msra.mxu0 %v786
        %860 = vmatmul.f32.gmra.mxu0 %v833
        %v861 = vpop.f32.mrf.mxu0
        %v862 = vadd.f32 %v815, %v861
        %863 = vmatmul.f32.gmra.mxu0 %v836
        %v864 = vpop.f32.mrf.mxu0
        %v865 = vadd.f32 %v820, %v864
        %866 = vmatmul.f32.gmra.mxu0 %v839
        %v867 = vpop.f32.mrf.mxu0
        %v868 = vadd.f32 %v825, %v867
        %869 = vmatmul.f32.gmra.mxu0 %v842
        %v870 = vpop.f32.mrf.mxu0
        %v871 = vadd.f32 %v830, %v870
        %872 = vdwg.mxu0
        %873 = vmatpush.msra.mxu0 0.0
        %874 = vmatpush.msra.mxu0 0.0
        %875 = vmatpush.msra.mxu0 0.0
        %876 = vmatpush.msra.mxu0 0.0
        %877 = vmatpush.msra.mxu0 0.0
        %878 = vmatpush.msra.mxu0 0.0
        %879 = vmatpush.msra.mxu0 0.0
        %880 = vmatpush.msra.mxu0 0.0
        %881 = vmatpush.msra.mxu0 0.0
        %882 = vmatpush.msra.mxu0 0.0
        %883 = vmatpush.msra.mxu0 0.0
        %884 = vmatpush.msra.mxu0 0.0
        %885 = vmatpush.msra.mxu0 %v799
        %886 = vmatpush.msra.mxu0 %v795
        %887 = vmatpush.msra.mxu0 %v791
        %888 = vmatpush.msra.mxu0 %v787
        %889 = vmatmul.f32.gmra.mxu0 %v833
        %v890 = vpop.f32.mrf.mxu0
        %v891 = vadd.f32 %v815, %v890
        %892 = vmatmul.f32.gmra.mxu0 %v836
        %v893 = vpop.f32.mrf.mxu0
        %v894 = vadd.f32 %v820, %v893
        %895 = vmatmul.f32.gmra.mxu0 %v839
        %v896 = vpop.f32.mrf.mxu0
        %v897 = vadd.f32 %v825, %v896
        %898 = vmatmul.f32.gmra.mxu0 %v842
        %v899 = vpop.f32.mrf.mxu0
        %v900 = vadd.f32 %v830, %v899
        %901 = vdwg.mxu0
        %902 = vmatpush.msra.mxu0 0.0
        %903 = vmatpush.msra.mxu0 0.0
        %904 = vmatpush.msra.mxu0 0.0
        %905 = vmatpush.msra.mxu0 0.0
        %906 = vmatpush.msra.mxu0 0.0
        %907 = vmatpush.msra.mxu0 0.0
        %908 = vmatpush.msra.mxu0 0.0
        %909 = vmatpush.msra.mxu0 0.0
        %910 = vmatpush.msra.mxu0 0.0
        %911 = vmatpush.msra.mxu0 0.0
        %912 = vmatpush.msra.mxu0 0.0
        %913 = vmatpush.msra.mxu0 0.0
        %914 = vmatpush.msra.mxu0 %v800
        %915 = vmatpush.msra.mxu0 %v796
        %916 = vmatpush.msra.mxu0 %v792
        %917 = vmatpush.msra.mxu0 %v788
        %918 = vmatmul.f32.gmra.mxu0 %v833
        %v919 = vpop.f32.mrf.mxu0
        %v920 = vadd.f32 %v815, %v919
        %921 = vmatmul.f32.gmra.mxu0 %v836
        %v922 = vpop.f32.mrf.mxu0
        %v923 = vadd.f32 %v820, %v922
        %924 = vmatmul.f32.gmra.mxu0 %v839
        %v925 = vpop.f32.mrf.mxu0
        %v926 = vadd.f32 %v825, %v925
        %927 = vmatmul.f32.gmra.mxu0 %v842
        %v928 = vpop.f32.mrf.mxu0
        %v929 = vadd.f32 %v830, %v928
        %930 = vdwg.mxu0
        %931 = vmatpush.msra.mxu0 0.0
        %932 = vmatpush.msra.mxu0 0.0
        %933 = vmatpush.msra.mxu0 0.0
        %934 = vmatpush.msra.mxu0 0.0
        %935 = vmatpush.msra.mxu0 0.0
        %936 = vmatpush.msra.mxu0 0.0
        %937 = vmatpush.msra.mxu0 0.0
        %938 = vmatpush.msra.mxu0 0.0
        %939 = vmatpush.msra.mxu0 0.0
        %940 = vmatpush.msra.mxu0 0.0
        %941 = vmatpush.msra.mxu0 0.0
        %942 = vmatpush.msra.mxu0 0.0
        %943 = vmatpush.msra.mxu0 %v801
        %944 = vmatpush.msra.mxu0 %v797
        %945 = vmatpush.msra.mxu0 %v793
        %946 = vmatpush.msra.mxu0 %v789
        %947 = vmatmul.f32.gmra.mxu0 %v833
        %v948 = vpop.f32.mrf.mxu0
        %v949 = vadd.f32 %v815, %v948
        %950 = vmatmul.f32.gmra.mxu0 %v836
        %v951 = vpop.f32.mrf.mxu0
        %v952 = vadd.f32 %v820, %v951
        %953 = vmatmul.f32.gmra.mxu0 %v839
        %v954 = vpop.f32.mrf.mxu0
        %v955 = vadd.f32 %v825, %v954
        %956 = vmatmul.f32.gmra.mxu0 %v842
        %v957 = vpop.f32.mrf.mxu0
        %v958 = vadd.f32 %v830, %v957
        %959 = vdwg.mxu0
        %v960 = vld [vmem:[%s5] sm:$0x1]
        %v961 = vld [vmem:[#allocation2] sm:$0x1]
        %963 = vset.pattern.permute.xlu0 0
        %964 = vperm.xlu0 %963, %v961
        %v965 = vpop.permute.xlu0 %964
        %v967 = vperm.slane %v965, 0
        %v969 = vsel %vm483, %v960, 0
        %971 = vmatpush.msra.mxu0 0.0
        %972 = vmatpush.msra.mxu0 0.0
        %973 = vmatpush.msra.mxu0 0.0
        %974 = vmatpush.msra.mxu0 0.0
        %975 = vmatpush.msra.mxu0 0.0
        %976 = vmatpush.msra.mxu0 0.0
        %977 = vmatpush.msra.mxu0 0.0
        %978 = vmatpush.msra.mxu0 0.0
        %979 = vmatpush.msra.mxu0 0.0
        %980 = vmatpush.msra.mxu0 0.0
        %981 = vmatpush.msra.mxu0 0.0
        %982 = vmatpush.msra.mxu0 0.0
        %983 = vmatpush.msra.mxu0 %v871
        %984 = vmatpush.msra.mxu0 %v868
        %985 = vmatpush.msra.mxu0 %v865
        %986 = vmatpush.msra.mxu0 %v862
        %987 = vmatmul.f32.gmra.mxu0 %v969
        %v988 = vpop.f32.mrf.mxu0
        %v989 = vadd.f32 %v967, %v988
        %990 = vdwg.mxu0
        %991 = vmatpush.msra.mxu0 0.0
        %992 = vmatpush.msra.mxu0 0.0
        %993 = vmatpush.msra.mxu0 0.0
        %994 = vmatpush.msra.mxu0 0.0
        %995 = vmatpush.msra.mxu0 0.0
        %996 = vmatpush.msra.mxu0 0.0
        %997 = vmatpush.msra.mxu0 0.0
        %998 = vmatpush.msra.mxu0 0.0
        %999 = vmatpush.msra.mxu0 0.0
        %1000 = vmatpush.msra.mxu0 0.0
        %1001 = vmatpush.msra.mxu0 0.0
        %1002 = vmatpush.msra.mxu0 0.0
        %1003 = vmatpush.msra.mxu0 %v900
        %1004 = vmatpush.msra.mxu0 %v897
        %1005 = vmatpush.msra.mxu0 %v894
        %1006 = vmatpush.msra.mxu0 %v891
        %1007 = vmatmul.f32.gmra.mxu0 %v969
        %v1008 = vpop.f32.mrf.mxu0
        %v1009 = vadd.f32 %v967, %v1008
        %1010 = vdwg.mxu0
        %1011 = vmatpush.msra.mxu0 0.0
        %1012 = vmatpush.msra.mxu0 0.0
        %1013 = vmatpush.msra.mxu0 0.0
        %1014 = vmatpush.msra.mxu0 0.0
        %1015 = vmatpush.msra.mxu0 0.0
        %1016 = vmatpush.msra.mxu0 0.0
        %1017 = vmatpush.msra.mxu0 0.0
        %1018 = vmatpush.msra.mxu0 0.0
        %1019 = vmatpush.msra.mxu0 0.0
        %1020 = vmatpush.msra.mxu0 0.0
        %1021 = vmatpush.msra.mxu0 0.0
        %1022 = vmatpush.msra.mxu0 0.0
        %1023 = vmatpush.msra.mxu0 %v929
        %1024 = vmatpush.msra.mxu0 %v926
        %1025 = vmatpush.msra.mxu0 %v923
        %1026 = vmatpush.msra.mxu0 %v920
        %1027 = vmatmul.f32.gmra.mxu0 %v969
        %v1028 = vpop.f32.mrf.mxu0
        %v1029 = vadd.f32 %v967, %v1028
        %1030 = vdwg.mxu0
        %1031 = vmatpush.msra.mxu0 0.0
        %1032 = vmatpush.msra.mxu0 0.0
        %1033 = vmatpush.msra.mxu0 0.0
        %1034 = vmatpush.msra.mxu0 0.0
        %1035 = vmatpush.msra.mxu0 0.0
        %1036 = vmatpush.msra.mxu0 0.0
        %1037 = vmatpush.msra.mxu0 0.0
        %1038 = vmatpush.msra.mxu0 0.0
        %1039 = vmatpush.msra.mxu0 0.0
        %1040 = vmatpush.msra.mxu0 0.0
        %1041 = vmatpush.msra.mxu0 0.0
        %1042 = vmatpush.msra.mxu0 0.0
        %1043 = vmatpush.msra.mxu0 %v958
        %1044 = vmatpush.msra.mxu0 %v955
        %1045 = vmatpush.msra.mxu0 %v952
        %1046 = vmatpush.msra.mxu0 %v949
        %1047 = vmatmul.f32.gmra.mxu0 %v969
        %v1048 = vpop.f32.mrf.mxu0
        %v1049 = vadd.f32 %v967, %v1048
        %1050 = vdwg.mxu0
        %v1055 = vrot.slane %v1009, 7
        %v1056 = vrot.slane %v1029, 6
        %v1057 = vrot.slane %v1049, 5
        %vm1058 = vcmask 1040384
        %v1059 = vsel %vm1058, %v989, %v1055
        %vm1060 = vcmask 1042434
        %v1061 = vsel %vm1060, %v1056, %v1057
        %v1062 = vsel %vm330, %v1059, %v1061
        %v1064 = vlaneseq
        %vm1065 = vcmp.ge.s32.totalorder %v1064, 0
        %vm1066 = vcmp.lt.s32.totalorder %v1064, 512
        %vm1067 = vmand %vm1065, %vm1066
        %1068 = vst.msk [vmem:[%s274] sm:$0xf] %vm1067, %v1062
        %s1069 = sand.u32 %s183, 1
        %s1070 = scalar_lea.sflag [#allocation4], %s1069
        %s1071 = sand.u32 %s183, 1
        %s1072 = smul.addr %s1071, 4
        %s1073 = scalar_lea.vmem [#allocation3], %s1072
        // Predicated region
        $region49: #{tpu_custom_call.1} parent=47 // pred_check
          %p1074 = pneg %p193
        $region50: #{tpu_custom_call.1} parent=47 // pred_check_branch
          %1076 = sbr.rel (%p1074) target = $region52
        $region51: #{tpu_custom_call.1} parent=47 // pred_region
          %s1077 = smul.u32 4, %s23
          %1079 = vsyncadd %s1070, 0
          %s1080 = scalar_lea.hbm %s7, %s1077
          %s1082 = sshll.u32 %s1073, 4
          %s1083 = int_to_ptr.vmem [resolvable:$true] %s1082
          %s1084 = sshll.u32 %s1080, 4
          %s1085 = int_to_ptr.hbm [resolvable:$true] %s1084
          %1087 = dma.vmem_to_hbm [thread:$0]  %s1083, 64, %s1085, %s1070
        $region52: #{tpu_custom_call.1} parent=47 // pred_fallthru
          _
      $region48: #{tpu_custom_call.1} parent=5 // pred_fallthru
        _
      %p1088 = scmp.le.s32.totalorder 2, %s18
      // Predicated region
      $region53: #{tpu_custom_call.1} parent=5 // pred_check
        %p1089 = pneg %p1088
      $region54: #{tpu_custom_call.1} parent=5 // pred_check_branch
        %1091 = sbr.rel (%p1089) target = $region56
      $region55: #{tpu_custom_call.1} parent=5 // pred_region
        %s1092 = ssub.s32 %s18, 2
        // Predicated region
        $region57: #{tpu_custom_call.1} parent=55 // pred_check
          %p1093 = pneg %p199
        $region58: #{tpu_custom_call.1} parent=55 // pred_check_branch
          %1095 = sbr.rel (%p1093) target = $region60
        $region59: #{tpu_custom_call.1} parent=55 // pred_region
          %s1096 = sand.u32 %s184, 1
          %s1097 = scalar_lea.sflag [#allocation4], %s1096
          %s1098 = sand.u32 %s184, 1
          %s1099 = smul.addr %s1098, 4
          %s1100 = scalar_lea.vmem [#allocation3], %s1099
          %1102 = dma.done %s1097, 64
        $region60: #{tpu_custom_call.1} parent=55 // pred_fallthru
          _
      $region56: #{tpu_custom_call.1} parent=5 // pred_fallthru
        _
    $region6: #{tpu_custom_call.1} parent=1 // loop_footer
      %s22 = sadd.s32 1, %s18
    $region7: #{tpu_custom_call.1} parent=1 // loop_footer_branch
      %17 = sbr.rel target = $region3
    $region8: #{tpu_custom_call.1} parent=1 // loop_exit
      _
    %1103 = vsyncpa [#allocation4], 1
    %s1104 = scalar_lea.sflag [#allocation4], 1
    %1105 = vsyncpa %s1104, 1

</llo_original>
